<compile_context>
chip_gen: v7x
topology: tpu7x:2x2x1
jax: 0.10.0
libtpu: 0.0.40
codegen_flags: <defaults>
</compile_context>

<pallas_src>
import jax
import jax.numpy as jnp
import numpy as np
from jax.experimental import pallas as pl
from jax.experimental.pallas import tpu as pltpu

LANES = 128
TARGET_ROW_TILE = 8192          # 8192 x 128 x 4B = 4 MiB per f32 input block
NCORES_MAX = 2                  # v7x has 2 TensorCores; extra axis harmless elsewhere
VMEM_LIMIT_BYTES = 48 * 1024 * 1024


def _round_up(a, b):
    return (a + b - 1) // b * b


def _sublane_granule(dtype):
    itemsize = np.dtype(dtype).itemsize
    if itemsize >= 4:
        return 8
    if itemsize == 2:
        return 16
    return 32


def _pow_term(one_minus_p, gamma):
    """(1-p)**gamma, strength-reduced for small integer gamma (default 2)."""
    g = float(gamma)
    if g.is_integer() and 0.0 <= g <= 8.0:
        ig = int(g)
        if ig == 0:
            return jnp.ones_like(one_minus_p)
        out = one_minus_p
        for _ in range(ig - 1):
            out = out * one_minus_p
        return out
    return jnp.power(one_minus_p, g)


def _focal_terms(p, t, w, gamma, alpha):
    """Shared per-element focal-loss formula (kernel body + XLA tail).

    Single-log formulation: identical to the PyTorch indicator-multiply form
    for pred strictly in (0,1); differs only on the inf*0=NaN edge cases at
    pred exactly 0/1.
    """
    p = p.astype(jnp.float32)
    if t.dtype == jnp.bool_:
        is_pos = t
        is_neg = jnp.logical_not(t)
    else:
        is_pos = t == jnp.asarray(1, t.dtype)
        is_neg = t == jnp.asarray(0, t.dtype)

    one_minus_p = 1.0 - p
    lg = jnp.log(jnp.where(is_pos, p, one_minus_p))   # one EUP log per element

    pos_factor = float(alpha) * _pow_term(one_minus_p, gamma)
    neg_factor = p * p
    if w is not None:
        # TODO(synk): `neg_weights` undefined in PyTorch source; interpreted
        # as forward()'s `weights` argument (1.0 when None).
        neg_factor = neg_factor * w.astype(jnp.float32)
    factor = jnp.where(is_pos, pos_factor, jnp.where(is_neg, neg_factor, 0.0))
    return -(lg * factor)


def _make_kernel(*, gamma, alpha, m_rows, row_tile, num_blocks,
                 steps_per_core, has_weights, has_dup):
    last_has_tail = (m_rows % row_tile) != 0   # static

    def kernel(*refs):
        if has_weights:
            pred_ref, target_ref, w_ref, out_ref = refs
        else:
            pred_ref, target_ref, out_ref = refs
            w_ref = None

        c = pl.program_id(0)      # core split (parallel)
        i = pl.program_id(1)      # reduction steps within a core (arbitrary)
        blk = c * steps_per_core + i

        @pl.when(i == 0)
        def _init():
            out_ref[...] = jnp.zeros_like(out_ref)

        loss = _focal_terms(pred_ref[...], target_ref[...],
                            w_ref[...] if has_weights else None, gamma, alpha)

        def _accumulate(val):
            # Tile-aligned reshape (view) + pure-VPU adds into the resident
            # (8,128) accumulator; no XLU cross-sublane reduce per step.
            out_ref[...] += val.reshape(row_tile // 8, 8, LANES).sum(axis=0)

        if last_has_tail:
            @pl.when(blk == num_blocks - 1)
            def _tail_block():
                row_ids = blk * row_tile + jax.lax.broadcasted_iota(
                    jnp.int32, (row_tile, LANES), 0)
                _accumulate(jnp.where(row_ids < m_rows, loss, 0.0))

            @pl.when(blk < num_blocks - 1)
            def _full_block():
                _accumulate(loss)
        elif has_dup:
            @pl.when(blk < num_blocks)
            def _valid_block():
                _accumulate(loss)
        else:
            _accumulate(loss)

    return kernel


def focal_loss(pred, target, weights=None, *, gamma=2, alpha=0.25, aver=False,
               row_tile=None):
    """Pallas TPU implementation of Focalloss.forward. Returns a scalar."""
    n_elems = pred.size
    if not jnp.issubdtype(pred.dtype, jnp.floating):
        pred = pred.astype(jnp.float32)
    # target / weights stream in native dtype; bool -> int8 (1 byte/elem)
    # to sidestep i1 memref handling without inflating DMA bytes.
    if target.dtype == jnp.bool_:
        target = target.astype(jnp.int8)

    has_weights = weights is not None
    if has_weights:
        weights = jnp.asarray(weights)
        if weights.dtype == jnp.bool_:
            weights = weights.astype(jnp.int8)
        if weights.shape != pred.shape:
            # TODO(synk): small broadcastable weights could be fed via SMEM /
            # non-tiled block instead of materializing a full-size tensor.
            weights = jnp.broadcast_to(weights, pred.shape)

    flat = [pred.reshape(-1), target.reshape(-1)]
    if has_weights:
        flat.append(weights.reshape(-1))

    m_rows = n_elems // LANES
    rem = n_elems - m_rows * LANES
    main_n = m_rows * LANES

    total = jnp.zeros((), jnp.float32)

    if m_rows > 0:
        if rem:
            args2d = [a[:main_n].reshape(m_rows, LANES) for a in flat]
        else:
            args2d = [a.reshape(m_rows, LANES) for a in flat]

        granule = max(_sublane_granule(a.dtype) for a in args2d)
        if row_tile is None:
            rt = min(TARGET_ROW_TILE, _round_up(m_rows, granule))
        else:
            rt = _round_up(max(int(row_tile), granule), granule)

        num_blocks = pl.cdiv(m_rows, rt)
        ncores = NCORES_MAX if num_blocks >= NCORES_MAX else 1
        steps_per_core = pl.cdiv(num_blocks, ncores)
        has_dup = ncores * steps_per_core != num_blocks

        def in_map(c, i):
            blk = c * steps_per_core + i
            if has_dup:
                blk = jnp.minimum(blk, num_blocks - 1)
            return (blk, 0)

        in_spec = pl.BlockSpec((rt, LANES), in_map)

        kernel = _make_kernel(
            gamma=gamma, alpha=alpha, m_rows=m_rows, row_tile=rt,
            num_blocks=num_blocks, steps_per_core=steps_per_core,
            has_weights=has_weights, has_dup=has_dup)

        partials = pl.pallas_call(
            kernel,
            out_shape=jax.ShapeDtypeStruct((ncores * 8, LANES), jnp.float32),
            grid_spec=pltpu.PrefetchScalarGridSpec(
                num_scalar_prefetch=0,
                grid=(ncores, steps_per_core),
                in_specs=[in_spec] * len(args2d),
                out_specs=pl.BlockSpec((8, LANES), lambda c, i: (c, 0)),
            ),
            compiler_params=pltpu.CompilerParams(
                # TODO(synk): if an xprof trace shows one v7x TC idle, switch
                # to (pltpu.CORE_PARALLEL, pltpu.ARBITRARY).
                dimension_semantics=("parallel", "arbitrary"),
                vmem_limit_bytes=VMEM_LIMIT_BYTES,
            ),
        )(*args2d)
        total = total + jnp.sum(partials)

    if rem:
        tail = [a[main_n:] for a in flat]
        tail_w = tail[2] if has_weights else None
        total = total + jnp.sum(_focal_terms(tail[0], tail[1], tail_w,
                                             gamma, alpha))

    if aver:
        total = total / jnp.float32(n_elems)
    return total


def _focal_loss_ref(pred, target, weights=None, *, gamma=2, alpha=0.25, aver=False):
    """Pure-JAX reference mirroring the PyTorch forward (indicator-multiply)."""
    pred = pred.astype(jnp.float32)
    target = target.astype(jnp.float32)
    w = (jnp.ones_like(pred) if weights is None
         else jnp.broadcast_to(weights, pred.shape).astype(jnp.float32))
    pos_inds = (target == 1.0).astype(jnp.float32)
    neg_inds = (target == 0.0).astype(jnp.float32)
    pos_loss = -alpha * jnp.log(pred) * jnp.power(1.0 - pred, gamma) * pos_inds
    neg_loss = -jnp.log(1.0 - pred) * jnp.power(pred, 2) * w * neg_inds
    loss = pos_loss + neg_loss
    return jnp.mean(loss) if aver else jnp.sum(loss)


if __name__ == "__main__":
    key = jax.random.PRNGKey(0)
    k1, k2, k3, k4, k5, k6, k7 = jax.random.split(key, 7)

    # Small NCHW inputs: batch=2, channels=4, spatial=16x16.
    shape = (2, 4, 16, 16)
    # pred in (0, 1), bounded away from {0,1} so log() is finite.
    pred = jax.nn.sigmoid(jax.random.normal(k1, shape, jnp.float32)) * 0.98 + 0.01
    target = (jax.random.uniform(k2, shape) > 0.5).astype(jnp.float32)

    out = jax.block_until_ready(focal_loss(pred, target, gamma=2, alpha=0.25))
    ref = _focal_loss_ref(pred, target, gamma=2, alpha=0.25)
    assert jnp.allclose(out, ref, rtol=1e-5, atol=1e-5), (out, ref)

    # Multi-block + two-core grid split (small row_tile override).
    out2 = jax.block_until_ready(focal_loss(pred, target, row_tile=8))
    assert jnp.allclose(out2, ref, rtol=1e-5, atol=1e-5), (out2, ref)

    # Native bool target (streamed as int8, no f32 cast) + overhanging block.
    tbool = jax.random.uniform(k3, shape) > 0.5
    outb = jax.block_until_ready(focal_loss(pred, tbool))
    refb = _focal_loss_ref(pred, tbool)
    assert jnp.allclose(outb, refb, rtol=1e-5, atol=1e-5), (outb, refb)

    # Partial last block + weights + aver=True.
    shape3 = (2, 4, 12, 16)  # 1536 elems -> 12 rows of 128
    pred3 = jax.nn.sigmoid(jax.random.normal(k4, shape3, jnp.float32)) * 0.98 + 0.01
    target3 = (jax.random.uniform(k5, shape3) > 0.5).astype(jnp.float32)
    w3 = jax.random.uniform(k6, shape3, jnp.float32)
    out3 = jax.block_until_ready(
        focal_loss(pred3, target3, w3, aver=True, row_tile=8))
    ref3 = _focal_loss_ref(pred3, target3, w3, aver=True)
    assert jnp.allclose(out3, ref3, rtol=1e-5, atol=1e-5), (out3, ref3)

    # numel % 128 != 0: truncated main slab + tiny XLA tail sum.
    shape4 = (2, 3, 11, 7)   # 462 elems: 3 full rows + 78-element tail
    pred4 = jax.nn.sigmoid(jax.random.normal(k7, shape4, jnp.float32)) * 0.98 + 0.01
    target4 = (jax.random.uniform(k2, shape4) > 0.5).astype(jnp.float32)
    out4 = jax.block_until_ready(focal_loss(pred4, target4))
    ref4 = _focal_loss_ref(pred4, target4)
    assert jnp.allclose(out4, ref4, rtol=1e-5, atol=1e-5), (out4, ref4)

    print("KERNEL_OK")
</pallas_src>

<mosaic_0001>
module attributes {stable_mosaic.version = 11 : i64} {
  func.func @kernel(%arg0: i32, %arg1: i32, %arg2: memref<16x128xf32, #tpu.memory_space<vmem>>, %arg3: memref<16x128xf32, #tpu.memory_space<vmem>>, %arg4: memref<8x128xf32, #tpu.memory_space<vmem>>) attributes {dimension_semantics = [#tpu.dimension_semantics<parallel>, #tpu.dimension_semantics<arbitrary>], iteration_bounds = array<i64: 1, 1>, scalar_prefetch = 0 : i64, scratch_operands = 0 : i64, tpu.core_type = #tpu.core_type<tc>, window_params = [{transform_indices = @transform_0, window_bounds = array<i64: 16, 128>}, {transform_indices = @transform_1, window_bounds = array<i64: 16, 128>}, {transform_indices = @transform_2, window_bounds = array<i64: 8, 128>}]} {
    %c0_i32 = arith.constant 0 : i32
    %0 = arith.cmpi eq, %arg1, %c0_i32 : i32
    %1 = arith.extui %0 : i1 to i32
    %c0_i32_0 = arith.constant 0 : i32
    %2 = arith.cmpi ne, %1, %c0_i32_0 : i32
    scf.if %2 {
      %cst_14 = arith.constant 0.000000e+00 : f32
      %28 = vector.broadcast %cst_14 : f32 to vector<8x128xf32>
      %c0_15 = arith.constant 0 : index
      %c0_16 = arith.constant 0 : index
      %29 = vector.load %arg4[%c0_15, %c0_16] : memref<8x128xf32, #tpu.memory_space<vmem>>, vector<8x128xf32>
      tpu.vector_store %arg4[%c0_15, %c0_16], %28 {strides = array<i32>} : memref<8x128xf32, #tpu.memory_space<vmem>>, vector<8x128xf32>,
    } else {
    }
    %c0 = arith.constant 0 : index
    %c0_1 = arith.constant 0 : index
    %3 = vector.load %arg2[%c0, %c0_1] : memref<16x128xf32, #tpu.memory_space<vmem>>, vector<16x128xf32>
    %c0_2 = arith.constant 0 : index
    %c0_3 = arith.constant 0 : index
    %4 = vector.load %arg3[%c0_2, %c0_3] : memref<16x128xf32, #tpu.memory_space<vmem>>, vector<16x128xf32>
    %cst = arith.constant 1.000000e+00 : f32
    %5 = vector.broadcast %cst : f32 to vector<16x128xf32>
    %6 = arith.cmpf oeq, %4, %5 : vector<16x128xf32>
    %cst_4 = arith.constant 0.000000e+00 : f32
    %7 = vector.broadcast %cst_4 : f32 to vector<16x128xf32>
    %8 = arith.cmpf oeq, %4, %7 : vector<16x128xf32>
    %cst_5 = arith.constant 1.000000e+00 : f32
    %9 = vector.broadcast %cst_5 : f32 to vector<16x128xf32>
    %10 = arith.subf %9, %3 : vector<16x128xf32>
    %11 = arith.select %6, %3, %10 : vector<16x128xi1>, vector<16x128xf32>
    %12 = math.log %11 : vector<16x128xf32>
    %13 = arith.mulf %10, %10 : vector<16x128xf32>
    %cst_6 = arith.constant 2.500000e-01 : f32
    %14 = vector.broadcast %cst_6 : f32 to vector<16x128xf32>
    %15 = arith.mulf %14, %13 : vector<16x128xf32>
    %16 = arith.mulf %3, %3 : vector<16x128xf32>
    %cst_7 = arith.constant 0.000000e+00 : f32
    %17 = vector.broadcast %cst_7 : f32 to vector<16x128xf32>
    %18 = arith.select %8, %16, %17 : vector<16x128xi1>, vector<16x128xf32>
    %19 = arith.select %6, %15, %18 : vector<16x128xi1>, vector<16x128xf32>
    %20 = arith.mulf %12, %19 : vector<16x128xf32>
    %cst_8 = arith.constant 0.000000e+00 : f32
    %21 = vector.broadcast %cst_8 : f32 to vector<16x128xf32>
    %22 = arith.subf %21, %20 : vector<16x128xf32>
    %c0_9 = arith.constant 0 : index
    %c0_10 = arith.constant 0 : index
    %23 = vector.load %arg4[%c0_9, %c0_10] : memref<8x128xf32, #tpu.memory_space<vmem>>, vector<8x128xf32>
    %24 = vector.shape_cast %22 : vector<16x128xf32> to vector<2x8x128xf32>
    %cst_11 = arith.constant dense<0.000000e+00> : vector<8x128xf32>
    %25 = vector.multi_reduction <add>, %24, %cst_11 [0] : vector<2x8x128xf32> to vector<8x128xf32>
    %26 = arith.addf %23, %25 : vector<8x128xf32>
    %c0_12 = arith.constant 0 : index
    %c0_13 = arith.constant 0 : index
    %27 = vector.load %arg4[%c0_12, %c0_13] : memref<8x128xf32, #tpu.memory_space<vmem>>, vector<8x128xf32>
    tpu.vector_store %arg4[%c0_12, %c0_13], %26 {strides = array<i32>} : memref<8x128xf32, #tpu.memory_space<vmem>>, vector<8x128xf32>,
    return
  }
  func.func @transform_0(%arg0: i32, %arg1: i32) -> (i32, i32) {
    %c1_i32 = arith.constant 1 : i32
    %0 = arith.muli %arg0, %c1_i32 : i32
    %1 = arith.addi %0, %arg1 : i32
    %c0_i32 = arith.constant 0 : i32
    %c0_i32_0 = arith.constant 0 : i32
    return %1, %c0_i32 : i32, i32
  }
  func.func @transform_1(%arg0: i32, %arg1: i32) -> (i32, i32) {
    %c1_i32 = arith.constant 1 : i32
    %0 = arith.muli %arg0, %c1_i32 : i32
    %1 = arith.addi %0, %arg1 : i32
    %c0_i32 = arith.constant 0 : i32
    %c0_i32_0 = arith.constant 0 : i32
    return %1, %c0_i32 : i32, i32
  }
  func.func @transform_2(%arg0: i32, %arg1: i32) -> (i32, i32) {
    %c0_i32 = arith.constant 0 : i32
    %c0_i32_0 = arith.constant 0 : i32
    return %arg0, %c0_i32 : i32, i32
  }
}

</mosaic_0001>

<llo_original>
// kernel: tpu_custom_call.1
$region0: #{tpu_custom_call.1}
  #allocation0 [shape = 'u32[]', space=smem, size = 0x4, offset = 0x4, fixed_abs, tag = 'smem constant byte address 0x4 - core index']
  #allocation1 [shape = 'u32[144,128]{1,0:T(1,128)}', space=vmem, size = 0x12000, scoped, tag = 'internal scratch']
  %s0 = inlined_call_operand.hbm [shape: f32[16,128], index: 0, kind: input, shape index: {}]
  %s1 = inlined_call_operand.hbm [shape: f32[16,128], index: 1, kind: input, shape index: {}]
  %s2 = inlined_call_operand.hbm [shape: f32[8,128], index: 2, kind: output, shape index: {}]
  %s3 = sld [smem:[#allocation0]]
  $region30: #{tpu_custom_call.1} parent=0
    _
  %s5 = ssub.s32 1, %s3
  %s6 = scalar_select 0, %s5, %s3
  $region1: #{tpu_custom_call.1} parent=0
    #allocation2 [shape = 'u8[8192]{0}', space=vmem, size = 0x2000, scoped, tag = 'input window, operand 0, single buffered']
    #allocation3 [shape = 's32[1]{0}', space=sflag, size = 0x4, scoped, tag = 'scoped memory for tpu_custom_call.1']
    #allocation4 [shape = 's32[1]{0}', space=sflag, size = 0x4, scoped, tag = 'scoped memory for tpu_custom_call.1']
    #allocation5 [shape = 'u8[8192]{0}', space=vmem, size = 0x2000, scoped, tag = 'input window, operand 1, single buffered']
    #allocation6 [shape = 's32[1]{0}', space=sflag, size = 0x4, scoped, tag = 'scoped memory for tpu_custom_call.1']
    #allocation7 [shape = 'u8[4096]{0}', space=vmem, size = 0x1000, scoped, tag = 'output window, operand 0, single buffered']
    %7 = vsyncpa [#allocation3], 0
    %8 = vsyncpa [#allocation6], 0
    %9 = vsyncpa [#allocation4], 0
    // Predicated region
    $region2: #{tpu_custom_call.1} parent=1 // pred_check
      _
    $region3: #{tpu_custom_call.1} parent=1 // pred_check_branch
      %11 = sbr.rel (0) target = $region5
    $region4: #{tpu_custom_call.1} parent=1 // pred_region
      %s12 = sadd.s32 0, 0
      %s13 = smul.u32 2, %s12
      %s15 = ssub.s32 256, 256
      %16 = vsyncadd [#allocation3], %s15
      %s17 = smul.addr %s13, 128
      %s18 = scalar_lea.hbm %s0, %s17
      %s19 = sshll.u32 [#allocation2], 4
      %s20 = int_to_ptr.vmem [resolvable:$true] %s19
      %25 = dma.hbm_to_vmem [thread:$0]  %s18, 256, %s20, [#allocation3], 128, 128, 8
    $region5: #{tpu_custom_call.1} parent=1 // pred_fallthru
      _
    // Predicated region
    $region6: #{tpu_custom_call.1} parent=1 // pred_check
      _
    $region7: #{tpu_custom_call.1} parent=1 // pred_check_branch
      %27 = sbr.rel (0) target = $region9
    $region8: #{tpu_custom_call.1} parent=1 // pred_region
      %s28 = sadd.s32 0, 0
      %s29 = smul.u32 2, %s28
      %s31 = ssub.s32 256, 256
      %32 = vsyncadd [#allocation6], %s31
      %s33 = smul.addr %s29, 128
      %s34 = scalar_lea.hbm %s1, %s33
      %s35 = sshll.u32 [#allocation5], 4
      %s36 = int_to_ptr.vmem [resolvable:$true] %s35
      %41 = dma.hbm_to_vmem [thread:$0]  %s34, 256, %s36, [#allocation6], 128, 128, 8
    $region9: #{tpu_custom_call.1} parent=1 // pred_fallthru
      _
    // Predicated region
    $region10: #{tpu_custom_call.1} parent=1 // pred_check
      _
    $region11: #{tpu_custom_call.1} parent=1 // pred_check_branch
      %43 = sbr.rel (0) target = $region13
    $region12: #{tpu_custom_call.1} parent=1 // pred_region
      %44 = dma.done [#allocation3], 256
    $region13: #{tpu_custom_call.1} parent=1 // pred_fallthru
      _
    // Predicated region
    $region14: #{tpu_custom_call.1} parent=1 // pred_check
      _
    $region15: #{tpu_custom_call.1} parent=1 // pred_check_branch
      %46 = sbr.rel (0) target = $region17
    $region16: #{tpu_custom_call.1} parent=1 // pred_region
      %47 = dma.done [#allocation6], 256
    $region17: #{tpu_custom_call.1} parent=1 // pred_fallthru
      _
    %s48 = sadd.s32 0, 0
    %s49 = smul.u32 2, %s48
    %s50 = sadd.s32 0, 0
    %s51 = smul.u32 2, %s50
    %p52 = scmp.eq.s32.totalorder 0, 0
    // Predicated region
    $region18: #{tpu_custom_call.1} parent=1 // pred_check
      %p53 = pneg %p52
    $region19: #{tpu_custom_call.1} parent=1 // pred_check_branch
      %55 = sbr.rel (%p53) target = $region21
    $region20: #{tpu_custom_call.1} parent=1 // pred_region
      %56 = vst [vmem:[#allocation7] sm:$0xff] 0.0
    $region21: #{tpu_custom_call.1} parent=1 // pred_fallthru
      _
    %v57 = vld [vmem:[#allocation2] sm:$0xff]
    %v58 = vld [vmem:[#allocation2 + $0x8] sm:$0xff]
    %v59 = vld [vmem:[#allocation5] sm:$0xff]
    %v60 = vld [vmem:[#allocation5 + $0x8] sm:$0xff]
    %vm61 = vcmp.eq.f32.partialorder %v59, 1.0
    %vm62 = vcmp.eq.f32.partialorder %v60, 1.0
    %vm63 = vcmp.eq.f32.partialorder %v59, 0.0
    %vm64 = vcmp.eq.f32.partialorder %v60, 0.0
    %v65 = vsub.f32 1.0, %v57
    %v66 = vsub.f32 1.0, %v58
    %v67 = vsel %vm61, %v57, %v65
    %v68 = vsel %vm62, %v58, %v66
    %v69 = vlog2.pop %v67
    %v70 = vmul.f32 %v69, 0.6931472
    %v71 = vlog2.pop %v68
    %v72 = vmul.f32 %v71, 0.6931472
    %v73 = vmul.f32 %v65, %v65
    %v74 = vmul.f32 %v66, %v66
    %v75 = vmul.f32 %v73, 0.25
    %v76 = vmul.f32 %v74, 0.25
    %v77 = vmul.f32 %v57, %v57
    %v78 = vmul.f32 %v58, %v58
    %v79 = vsel %vm63, %v77, 0.0
    %v80 = vsel %vm64, %v78, 0.0
    %v81 = vsel %vm61, %v75, %v79
    %v82 = vsel %vm62, %v76, %v80
    %v83 = vmul.f32 %v70, %v81
    %v84 = vmul.f32 %v72, %v82
    %v85 = vsub.f32 0.0, %v83
    %v86 = vsub.f32 0.0, %v84
    %v87 = vld [vmem:[#allocation7] sm:$0xff]
    %v88 = vadd.f32 %v85, %v86
    %v89 = vadd.f32 %v87, %v88
    %90 = vst [vmem:[#allocation7] sm:$0xff] %v89
    // Predicated region
    $region22: #{tpu_custom_call.1} parent=1 // pred_check
      _
    $region23: #{tpu_custom_call.1} parent=1 // pred_check_branch
      %92 = sbr.rel (0) target = $region25
    $region24: #{tpu_custom_call.1} parent=1 // pred_region
      %s94 = ssub.s32 128, 128
      %95 = vsyncadd [#allocation4], %s94
      %s97 = sshll.u32 [#allocation7], 4
      %s98 = int_to_ptr.vmem [resolvable:$true] %s97
      %100 = dma.vmem_to_hbm [thread:$0]  %s98, 128, %s2, [#allocation4]
    $region25: #{tpu_custom_call.1} parent=1 // pred_fallthru
      _
    // Predicated region
    $region26: #{tpu_custom_call.1} parent=1 // pred_check
      _
    $region27: #{tpu_custom_call.1} parent=1 // pred_check_branch
      %102 = sbr.rel (0) target = $region29
    $region28: #{tpu_custom_call.1} parent=1 // pred_region
      %103 = dma.done [#allocation4], 128
    $region29: #{tpu_custom_call.1} parent=1 // pred_fallthru
      _
    %104 = vsyncpa [#allocation3], 1
    %105 = vsyncpa [#allocation6], 1
    %106 = vsyncpa [#allocation4], 1

</llo_original>
